<compile_context>
chip_gen: v6e
topology: v6e:2x2x1
jax: 0.10.0
libtpu: 0.0.40
codegen_flags: <defaults>
</compile_context>

<pallas_src>
import numpy as np

import jax
import jax.numpy as jnp
from jax.experimental import pallas as pl
from jax.experimental.pallas import tpu as pltpu


# ----------------------------------------------------------------------------
# helpers
# ----------------------------------------------------------------------------
def _round_up(x: int, m: int) -> int:
    return (x + m - 1) // m * m


def _pick_tile(p: int, cap: int):
    """Pick a row-tile (multiple of 8, <= cap) minimizing padding waste."""
    n_tiles = -(-p // cap)                    # ceil(p / cap)
    tile = _round_up(-(-p // n_tiles), 8)     # ceil(p / n_tiles), rounded to 8
    return tile, tile * n_tiles               # (tile, padded_p)


# ----------------------------------------------------------------------------
# Kernel 1: first Conv2d (in_channels = 1) as im2col matmul + bias + ReLU
#   patch_ref: (1, TILE_P, 9)   w_ref: (9, Cpad)   b_ref: (1, Cpad)
#   o_ref:     (1, TILE_P, Cpad)
# ----------------------------------------------------------------------------
def _conv_full_kernel(patch_ref, w_ref, b_ref, o_ref):
    acc = jnp.dot(patch_ref[0], w_ref[...], preferred_element_type=jnp.float32)
    acc = acc + b_ref[...]
    o_ref[0] = jnp.maximum(acc, 0.0).astype(o_ref.dtype)


# ----------------------------------------------------------------------------
# Kernel 2: DepthwiseConv2d (groups = C) as 9-tap multiply-accumulate + bias + ReLU
#   patch_ref: (1, 9, TILE_P, Cpad)  w_ref: (9, Cpad)  b_ref: (1, Cpad)
#   o_ref:     (1, TILE_P, Cpad)
# ----------------------------------------------------------------------------
def _depthwise_conv_kernel(patch_ref, w_ref, b_ref, o_ref):
    w = w_ref[...]                                     # (9, Cpad)
    acc = patch_ref[0, 0, :, :] * w[0:1, :]
    for k in range(1, 9):                              # unrolled: 9 taps
        acc = acc + patch_ref[0, k, :, :] * w[k:k + 1, :]
    acc = acc + b_ref[...]
    o_ref[0] = jnp.maximum(acc, 0.0).astype(o_ref.dtype)


# ----------------------------------------------------------------------------
# wrapper
# ----------------------------------------------------------------------------
def depthwise_conv2d_subsampling(x, input_lengths, w1, b1, w2, b2):
    """Pallas equivalent of DepthwiseConv2dSubsampling(1, C)(x, input_lengths).

    Args:
      x:             (B, T, D) inputs.
      input_lengths: (B,) int sequence lengths.
      w1, b1: first conv weights (C, 1, 3, 3) and bias (C,).
      w2, b2: depthwise conv weights (C, 1, 3, 3) and bias (C,).
    Returns:
      outputs: (B, T2, C * D2), dtype of x.
      output_lengths: (B,) int32.
    """
    B, T, D = x.shape
    C = w1.shape[0]
    assert T >= 7 and D >= 7, "need at least 7 frames/features for two 3x3 s=2 convs"

    orig_dtype = x.dtype
    xf = x.astype(jnp.float32)

    T1, D1 = (T - 3) // 2 + 1, (D - 3) // 2 + 1
    T2, D2 = (T1 - 3) // 2 + 1, (D1 - 3) // 2 + 1

    # --- lane-dense channel padding (no-op when C is already a multiple of 128)
    Cpad = _round_up(C, 128)
    w1m = jnp.zeros((9, Cpad), jnp.float32).at[:, :C].set(
        w1.reshape(C, 9).T.astype(jnp.float32))
    b1r = jnp.zeros((1, Cpad), jnp.float32).at[:, :C].set(
        b1.astype(jnp.float32)[None, :])
    w2m = jnp.zeros((9, Cpad), jnp.float32).at[:, :C].set(
        w2.reshape(C, 9).T.astype(jnp.float32))
    b2r = jnp.zeros((1, Cpad), jnp.float32).at[:, :C].set(
        b2.astype(jnp.float32)[None, :])

    # ------------------------------------------------------------------
    # Conv 1: im2col (XLA layout plumbing) + Pallas matmul/bias/ReLU kernel
    # ------------------------------------------------------------------
    P1 = T1 * D1
    taps1 = []
    for ki in range(3):
        for kj in range(3):
            sl = jax.lax.slice(
                xf, (0, ki, kj),
                (B, ki + 2 * (T1 - 1) + 1, kj + 2 * (D1 - 1) + 1),
                (1, 2, 2))
            taps1.append(sl.reshape(B, P1))
    patches1 = jnp.stack(taps1, axis=-1)                       # (B, P1, 9)
    tile1, P1pad = _pick_tile(P1, 512)
    patches1 = jnp.pad(patches1, ((0, 0), (0, P1pad - P1), (0, 0)))

    y1 = pl.pallas_call(
        _conv_full_kernel,
        out_shape=jax.ShapeDtypeStruct((B, P1pad, Cpad), jnp.float32),
        grid_spec=pltpu.PrefetchScalarGridSpec(
            num_scalar_prefetch=0,
            grid=(B, P1pad // tile1),
            in_specs=[
                pl.BlockSpec((1, tile1, 9), lambda b, p: (b, p, 0)),
                pl.BlockSpec((9, Cpad), lambda b, p: (0, 0)),
                pl.BlockSpec((1, Cpad), lambda b, p: (0, 0)),
            ],
            out_specs=pl.BlockSpec((1, tile1, Cpad), lambda b, p: (b, p, 0)),
        ),
        compiler_params=pltpu.CompilerParams(
            dimension_semantics=("parallel", "parallel")),
    )(patches1, w1m, b1r)

    y1 = y1[:, :P1, :].reshape(B, T1, D1, Cpad)                # channels-last

    # ------------------------------------------------------------------
    # Depthwise conv: 9 shifted slabs (XLA) + Pallas per-tap MAC kernel
    # ------------------------------------------------------------------
    P2 = T2 * D2
    taps2 = []
    for ki in range(3):
        for kj in range(3):
            sl = jax.lax.slice(
                y1, (0, ki, kj, 0),
                (B, ki + 2 * (T2 - 1) + 1, kj + 2 * (D2 - 1) + 1, Cpad),
                (1, 2, 2, 1))
            taps2.append(sl.reshape(B, P2, Cpad))
    patches2 = jnp.stack(taps2, axis=1)                        # (B, 9, P2, Cpad)
    tile2, P2pad = _pick_tile(P2, 128)
    patches2 = jnp.pad(patches2, ((0, 0), (0, 0), (0, P2pad - P2), (0, 0)))

    y2 = pl.pallas_call(
        _depthwise_conv_kernel,
        out_shape=jax.ShapeDtypeStruct((B, P2pad, Cpad), jnp.float32),
        grid_spec=pltpu.PrefetchScalarGridSpec(
            num_scalar_prefetch=0,
            grid=(B, P2pad // tile2),
            in_specs=[
                pl.BlockSpec((1, 9, tile2, Cpad), lambda b, p: (b, 0, p, 0)),
                pl.BlockSpec((9, Cpad), lambda b, p: (0, 0)),
                pl.BlockSpec((1, Cpad), lambda b, p: (0, 0)),
            ],
            out_specs=pl.BlockSpec((1, tile2, Cpad), lambda b, p: (b, p, 0)),
        ),
        compiler_params=pltpu.CompilerParams(
            dimension_semantics=("parallel", "parallel")),
    )(patches2, w2m, b2r)

    # --- final layout: (B,C,T2,D2).permute(0,2,1,3).view(B,T2,C*D2)
    y2 = y2[:, :P2, :C].reshape(B, T2, D2, C)                  # (B, T2, D2, C)
    outputs = jnp.transpose(y2, (0, 1, 3, 2)).reshape(B, T2, C * D2)
    outputs = outputs.astype(orig_dtype)

    output_lengths = jnp.right_shift(input_lengths.astype(jnp.int32), 2) - 1
    return outputs, output_lengths


# ----------------------------------------------------------------------------
# pure-numpy reference (port of the PyTorch module) for verification
# ----------------------------------------------------------------------------
def _conv2d_full_ref(x, w, b):            # x: (B,T,D), w: (C,1,3,3), b: (C,)
    B, T, D = x.shape
    C = w.shape[0]
    T1, D1 = (T - 3) // 2 + 1, (D - 3) // 2 + 1
    out = np.zeros((B, C, T1, D1), np.float32)
    for ki in range(3):
        for kj in range(3):
            sub = x[:, ki:ki + 2 * T1:2, kj:kj + 2 * D1:2]       # (B,T1,D1)
            out += w[None, :, 0, ki, kj, None, None] * sub[:, None, :, :]
    out += b[None, :, None, None]
    return np.maximum(out, 0.0)


def _conv2d_depthwise_ref(x, w, b):       # x: (B,C,T,D), w: (C,1,3,3), b: (C,)
    B, C, T, D = x.shape
    T1, D1 = (T - 3) // 2 + 1, (D - 3) // 2 + 1
    out = np.zeros((B, C, T1, D1), np.float32)
    for ki in range(3):
        for kj in range(3):
            sub = x[:, :, ki:ki + 2 * T1:2, kj:kj + 2 * D1:2]    # (B,C,T1,D1)
            out += w[None, :, 0, ki, kj, None, None] * sub
    out += b[None, :, None, None]
    return np.maximum(out, 0.0)


def _reference_forward(x, lengths, w1, b1, w2, b2):
    y1 = _conv2d_full_ref(x, w1, b1)
    y2 = _conv2d_depthwise_ref(y1, w2, b2)
    B, C, T2, D2 = y2.shape
    out = np.transpose(y2, (0, 2, 1, 3)).reshape(B, T2, C * D2)
    out_len = (lengths >> 2) - 1
    return out, out_len


# ----------------------------------------------------------------------------
if __name__ == "__main__":
    B, T, D, C = 2, 16, 32, 8            # small shapes: batch=2, time=16, feat=32, out_channels=8
    key = jax.random.PRNGKey(0)
    k1, k2, k3, k4, k5 = jax.random.split(key, 5)
    x = jax.random.normal(k1, (B, T, D), jnp.float32)
    w1 = 0.2 * jax.random.normal(k2, (C, 1, 3, 3), jnp.float32)
    b1 = 0.1 * jax.random.normal(k3, (C,), jnp.float32)
    w2 = 0.2 * jax.random.normal(k4, (C, 1, 3, 3), jnp.float32)
    b2 = 0.1 * jax.random.normal(k5, (C,), jnp.float32)
    input_lengths = jnp.array([16, 13], dtype=jnp.int32)

    fwd = jax.jit(depthwise_conv2d_subsampling)
    outputs, output_lengths = fwd(x, input_lengths, w1, b1, w2, b2)
    outputs = jax.block_until_ready(outputs)
    output_lengths = jax.block_until_ready(output_lengths)

    ref_out, ref_len = _reference_forward(
        np.asarray(x), np.asarray(input_lengths),
        np.asarray(w1), np.asarray(b1), np.asarray(w2), np.asarray(b2))

    assert outputs.shape == ref_out.shape, (outputs.shape, ref_out.shape)
    np.testing.assert_allclose(np.asarray(outputs), ref_out, rtol=1e-4, atol=1e-4)
    np.testing.assert_array_equal(np.asarray(output_lengths), ref_len)

    print("KERNEL_OK")
</pallas_src>

<mosaic_0001>
module attributes {stable_mosaic.version = 11 : i64} {
  func.func @_conv_full_kernel(%arg0: i32, %arg1: i32, %arg2: memref<1x112x9xf32, #tpu.memory_space<vmem>>, %arg3: memref<9x128xf32, #tpu.memory_space<vmem>>, %arg4: memref<1x128xf32, #tpu.memory_space<vmem>>, %arg5: memref<1x112x128xf32, #tpu.memory_space<vmem>>) attributes {dimension_semantics = [#tpu.dimension_semantics<parallel>, #tpu.dimension_semantics<parallel>], iteration_bounds = array<i64: 2, 1>, scalar_prefetch = 0 : i64, scratch_operands = 0 : i64, tpu.core_type = #tpu.core_type<tc>, window_params = [{transform_indices = @transform_0, window_bounds = array<i64: 1, 112, 9>}, {pipeline_mode = #tpu.pipeline_mode<synchronous>, transform_indices = @transform_1, window_bounds = array<i64: 9, 128>}, {pipeline_mode = #tpu.pipeline_mode<synchronous>, transform_indices = @transform_2, window_bounds = array<i64: 1, 128>}, {transform_indices = @transform_3, window_bounds = array<i64: 1, 112, 128>}]} {
    %c0 = arith.constant 0 : index
    %c0_0 = arith.constant 0 : index
    %c0_1 = arith.constant 0 : index
    %0 = vector.load %arg2[%c0, %c0_0, %c0_1] : memref<1x112x9xf32, #tpu.memory_space<vmem>>, vector<1x112x9xf32>
    %1 = vector.shape_cast %0 : vector<1x112x9xf32> to vector<112x9xf32>
    %c0_2 = arith.constant 0 : index
    %c0_3 = arith.constant 0 : index
    %2 = vector.load %arg3[%c0_2, %c0_3] : memref<9x128xf32, #tpu.memory_space<vmem>>, vector<9x128xf32>
    %cst = arith.constant dense<0.000000e+00> : vector<112x128xf32>
    %3 = tpu.matmul %1, %2, %cst {dimension_numbers = #tpu.dot_dimension_numbers<[1], [0], [0], [1], [0, 0, 1, 1], [], []>} : vector<112x9xf32>, vector<9x128xf32>, vector<112x128xf32> -> vector<112x128xf32>
    %c0_4 = arith.constant 0 : index
    %c0_5 = arith.constant 0 : index
    %4 = vector.load %arg4[%c0_4, %c0_5] : memref<1x128xf32, #tpu.memory_space<vmem>>, vector<1x128xf32>
    %5 = vector.broadcast %4 : vector<1x128xf32> to vector<112x128xf32>
    %6 = arith.addf %3, %5 : vector<112x128xf32>
    %cst_6 = arith.constant 0.000000e+00 : f32
    %7 = vector.broadcast %cst_6 : f32 to vector<112x128xf32>
    %8 = arith.maximumf %6, %7 : vector<112x128xf32>
    %c0_7 = arith.constant 0 : index
    %c0_8 = arith.constant 0 : index
    %c0_9 = arith.constant 0 : index
    %9 = vector.load %arg5[%c0_7, %c0_8, %c0_9] : memref<1x112x128xf32, #tpu.memory_space<vmem>>, vector<1x112x128xf32>
    %10 = vector.shape_cast %9 : vector<1x112x128xf32> to vector<112x128xf32>
    %11 = vector.shape_cast %8 : vector<112x128xf32> to vector<1x112x128xf32>
    tpu.vector_store %arg5[%c0_7, %c0_8, %c0_9], %11 {strides = array<i32>} : memref<1x112x128xf32, #tpu.memory_space<vmem>>, vector<1x112x128xf32>,
    return
  }
  func.func @transform_0(%arg0: i32, %arg1: i32) -> (i32, i32, i32) {
    %c0_i32 = arith.constant 0 : i32
    %c0_i32_0 = arith.constant 0 : i32
    return %arg0, %arg1, %c0_i32 : i32, i32, i32
  }
  func.func @transform_1(%arg0: i32, %arg1: i32) -> (i32, i32) {
    %c0_i32 = arith.constant 0 : i32
    %c0_i32_0 = arith.constant 0 : i32
    %c0_i32_1 = arith.constant 0 : i32
    return %c0_i32, %c0_i32_0 : i32, i32
  }
  func.func @transform_2(%arg0: i32, %arg1: i32) -> (i32, i32) {
    %c0_i32 = arith.constant 0 : i32
    %c0_i32_0 = arith.constant 0 : i32
    %c0_i32_1 = arith.constant 0 : i32
    return %c0_i32, %c0_i32_0 : i32, i32
  }
  func.func @transform_3(%arg0: i32, %arg1: i32) -> (i32, i32, i32) {
    %c0_i32 = arith.constant 0 : i32
    %c0_i32_0 = arith.constant 0 : i32
    return %arg0, %arg1, %c0_i32 : i32, i32, i32
  }
}

module attributes {stable_mosaic.version = 11 : i64} {
  func.func @_depthwise_conv_kernel(%arg0: i32, %arg1: i32, %arg2: memref<1x9x24x128xf32, #tpu.memory_space<vmem>>, %arg3: memref<9x128xf32, #tpu.memory_space<vmem>>, %arg4: memref<1x128xf32, #tpu.memory_space<vmem>>, %arg5: memref<1x24x128xf32, #tpu.memory_space<vmem>>) attributes {dimension_semantics = [#tpu.dimension_semantics<parallel>, #tpu.dimension_semantics<parallel>], iteration_bounds = array<i64: 2, 1>, scalar_prefetch = 0 : i64, scratch_operands = 0 : i64, tpu.core_type = #tpu.core_type<tc>, window_params = [{transform_indices = @transform_0, window_bounds = array<i64: 1, 9, 24, 128>}, {pipeline_mode = #tpu.pipeline_mode<synchronous>, transform_indices = @transform_1, window_bounds = array<i64: 9, 128>}, {pipeline_mode = #tpu.pipeline_mode<synchronous>, transform_indices = @transform_2, window_bounds = array<i64: 1, 128>}, {transform_indices = @transform_3, window_bounds = array<i64: 1, 24, 128>}]} {
    %c0 = arith.constant 0 : index
    %c0_0 = arith.constant 0 : index
    %0 = vector.load %arg3[%c0, %c0_0] : memref<9x128xf32, #tpu.memory_space<vmem>>, vector<9x128xf32>
    %c0_1 = arith.constant 0 : index
    %c0_2 = arith.constant 0 : index
    %c0_3 = arith.constant 0 : index
    %c0_4 = arith.constant 0 : index
    %1 = vector.load %arg2[%c0_1, %c0_2, %c0_3, %c0_4] : memref<1x9x24x128xf32, #tpu.memory_space<vmem>>, vector<1x1x24x128xf32>
    %2 = vector.shape_cast %1 : vector<1x1x24x128xf32> to vector<24x128xf32>
    %3 = vector.extract_strided_slice %0 {offsets = [0, 0], sizes = [1, 128], strides = [1, 1]} : vector<9x128xf32> to vector<1x128xf32>
    %4 = vector.broadcast %3 : vector<1x128xf32> to vector<24x128xf32>
    %5 = arith.mulf %2, %4 : vector<24x128xf32>
    %c0_5 = arith.constant 0 : index
    %c1 = arith.constant 1 : index
    %c0_6 = arith.constant 0 : index
    %c0_7 = arith.constant 0 : index
    %6 = vector.load %arg2[%c0_5, %c1, %c0_6, %c0_7] : memref<1x9x24x128xf32, #tpu.memory_space<vmem>>, vector<1x1x24x128xf32>
    %7 = vector.shape_cast %6 : vector<1x1x24x128xf32> to vector<24x128xf32>
    %8 = vector.extract_strided_slice %0 {offsets = [1, 0], sizes = [1, 128], strides = [1, 1]} : vector<9x128xf32> to vector<1x128xf32>
    %9 = vector.broadcast %8 : vector<1x128xf32> to vector<24x128xf32>
    %10 = arith.mulf %7, %9 : vector<24x128xf32>
    %11 = arith.addf %5, %10 : vector<24x128xf32>
    %c0_8 = arith.constant 0 : index
    %c2 = arith.constant 2 : index
    %c0_9 = arith.constant 0 : index
    %c0_10 = arith.constant 0 : index
    %12 = vector.load %arg2[%c0_8, %c2, %c0_9, %c0_10] : memref<1x9x24x128xf32, #tpu.memory_space<vmem>>, vector<1x1x24x128xf32>
    %13 = vector.shape_cast %12 : vector<1x1x24x128xf32> to vector<24x128xf32>
    %14 = vector.extract_strided_slice %0 {offsets = [2, 0], sizes = [1, 128], strides = [1, 1]} : vector<9x128xf32> to vector<1x128xf32>
    %15 = vector.broadcast %14 : vector<1x128xf32> to vector<24x128xf32>
    %16 = arith.mulf %13, %15 : vector<24x128xf32>
    %17 = arith.addf %11, %16 : vector<24x128xf32>
    %c0_11 = arith.constant 0 : index
    %c3 = arith.constant 3 : index
    %c0_12 = arith.constant 0 : index
    %c0_13 = arith.constant 0 : index
    %18 = vector.load %arg2[%c0_11, %c3, %c0_12, %c0_13] : memref<1x9x24x128xf32, #tpu.memory_space<vmem>>, vector<1x1x24x128xf32>
    %19 = vector.shape_cast %18 : vector<1x1x24x128xf32> to vector<24x128xf32>
    %20 = vector.extract_strided_slice %0 {offsets = [3, 0], sizes = [1, 128], strides = [1, 1]} : vector<9x128xf32> to vector<1x128xf32>
    %21 = vector.broadcast %20 : vector<1x128xf32> to vector<24x128xf32>
    %22 = arith.mulf %19, %21 : vector<24x128xf32>
    %23 = arith.addf %17, %22 : vector<24x128xf32>
    %c0_14 = arith.constant 0 : index
    %c4 = arith.constant 4 : index
    %c0_15 = arith.constant 0 : index
    %c0_16 = arith.constant 0 : index
    %24 = vector.load %arg2[%c0_14, %c4, %c0_15, %c0_16] : memref<1x9x24x128xf32, #tpu.memory_space<vmem>>, vector<1x1x24x128xf32>
    %25 = vector.shape_cast %24 : vector<1x1x24x128xf32> to vector<24x128xf32>
    %26 = vector.extract_strided_slice %0 {offsets = [4, 0], sizes = [1, 128], strides = [1, 1]} : vector<9x128xf32> to vector<1x128xf32>
    %27 = vector.broadcast %26 : vector<1x128xf32> to vector<24x128xf32>
    %28 = arith.mulf %25, %27 : vector<24x128xf32>
    %29 = arith.addf %23, %28 : vector<24x128xf32>
    %c0_17 = arith.constant 0 : index
    %c5 = arith.constant 5 : index
    %c0_18 = arith.constant 0 : index
    %c0_19 = arith.constant 0 : index
    %30 = vector.load %arg2[%c0_17, %c5, %c0_18, %c0_19] : memref<1x9x24x128xf32, #tpu.memory_space<vmem>>, vector<1x1x24x128xf32>
    %31 = vector.shape_cast %30 : vector<1x1x24x128xf32> to vector<24x128xf32>
    %32 = vector.extract_strided_slice %0 {offsets = [5, 0], sizes = [1, 128], strides = [1, 1]} : vector<9x128xf32> to vector<1x128xf32>
    %33 = vector.broadcast %32 : vector<1x128xf32> to vector<24x128xf32>
    %34 = arith.mulf %31, %33 : vector<24x128xf32>
    %35 = arith.addf %29, %34 : vector<24x128xf32>
    %c0_20 = arith.constant 0 : index
    %c6 = arith.constant 6 : index
    %c0_21 = arith.constant 0 : index
    %c0_22 = arith.constant 0 : index
    %36 = vector.load %arg2[%c0_20, %c6, %c0_21, %c0_22] : memref<1x9x24x128xf32, #tpu.memory_space<vmem>>, vector<1x1x24x128xf32>
    %37 = vector.shape_cast %36 : vector<1x1x24x128xf32> to vector<24x128xf32>
    %38 = vector.extract_strided_slice %0 {offsets = [6, 0], sizes = [1, 128], strides = [1, 1]} : vector<9x128xf32> to vector<1x128xf32>
    %39 = vector.broadcast %38 : vector<1x128xf32> to vector<24x128xf32>
    %40 = arith.mulf %37, %39 : vector<24x128xf32>
    %41 = arith.addf %35, %40 : vector<24x128xf32>
    %c0_23 = arith.constant 0 : index
    %c7 = arith.constant 7 : index
    %c0_24 = arith.constant 0 : index
    %c0_25 = arith.constant 0 : index
    %42 = vector.load %arg2[%c0_23, %c7, %c0_24, %c0_25] : memref<1x9x24x128xf32, #tpu.memory_space<vmem>>, vector<1x1x24x128xf32>
    %43 = vector.shape_cast %42 : vector<1x1x24x128xf32> to vector<24x128xf32>
    %44 = vector.extract_strided_slice %0 {offsets = [7, 0], sizes = [1, 128], strides = [1, 1]} : vector<9x128xf32> to vector<1x128xf32>
    %45 = vector.broadcast %44 : vector<1x128xf32> to vector<24x128xf32>
    %46 = arith.mulf %43, %45 : vector<24x128xf32>
    %47 = arith.addf %41, %46 : vector<24x128xf32>
    %c0_26 = arith.constant 0 : index
    %c8 = arith.constant 8 : index
    %c0_27 = arith.constant 0 : index
    %c0_28 = arith.constant 0 : index
    %48 = vector.load %arg2[%c0_26, %c8, %c0_27, %c0_28] : memref<1x9x24x128xf32, #tpu.memory_space<vmem>>, vector<1x1x24x128xf32>
    %49 = vector.shape_cast %48 : vector<1x1x24x128xf32> to vector<24x128xf32>
    %50 = vector.extract_strided_slice %0 {offsets = [8, 0], sizes = [1, 128], strides = [1, 1]} : vector<9x128xf32> to vector<1x128xf32>
    %51 = vector.broadcast %50 : vector<1x128xf32> to vector<24x128xf32>
    %52 = arith.mulf %49, %51 : vector<24x128xf32>
    %53 = arith.addf %47, %52 : vector<24x128xf32>
    %c0_29 = arith.constant 0 : index
    %c0_30 = arith.constant 0 : index
    %54 = vector.load %arg4[%c0_29, %c0_30] : memref<1x128xf32, #tpu.memory_space<vmem>>, vector<1x128xf32>
    %55 = vector.broadcast %54 : vector<1x128xf32> to vector<24x128xf32>
    %56 = arith.addf %53, %55 : vector<24x128xf32>
    %cst = arith.constant 0.000000e+00 : f32
    %57 = vector.broadcast %cst : f32 to vector<24x128xf32>
    %58 = arith.maximumf %56, %57 : vector<24x128xf32>
    %c0_31 = arith.constant 0 : index
    %c0_32 = arith.constant 0 : index
    %c0_33 = arith.constant 0 : index
    %59 = vector.load %arg5[%c0_31, %c0_32, %c0_33] : memref<1x24x128xf32, #tpu.memory_space<vmem>>, vector<1x24x128xf32>
    %60 = vector.shape_cast %59 : vector<1x24x128xf32> to vector<24x128xf32>
    %61 = vector.shape_cast %58 : vector<24x128xf32> to vector<1x24x128xf32>
    tpu.vector_store %arg5[%c0_31, %c0_32, %c0_33], %61 {strides = array<i32>} : memref<1x24x128xf32, #tpu.memory_space<vmem>>, vector<1x24x128xf32>,
    return
  }
  func.func @transform_0(%arg0: i32, %arg1: i32) -> (i32, i32, i32, i32) {
    %c0_i32 = arith.constant 0 : i32
    %c0_i32_0 = arith.constant 0 : i32
    %c0_i32_1 = arith.constant 0 : i32
    return %arg0, %c0_i32, %arg1, %c0_i32_0 : i32, i32, i32, i32
  }
  func.func @transform_1(%arg0: i32, %arg1: i32) -> (i32, i32) {
    %c0_i32 = arith.constant 0 : i32
    %c0_i32_0 = arith.constant 0 : i32
    %c0_i32_1 = arith.constant 0 : i32
    return %c0_i32, %c0_i32_0 : i32, i32
  }
  func.func @transform_2(%arg0: i32, %arg1: i32) -> (i32, i32) {
    %c0_i32 = arith.constant 0 : i32
    %c0_i32_0 = arith.constant 0 : i32
    %c0_i32_1 = arith.constant 0 : i32
    return %c0_i32, %c0_i32_0 : i32, i32
  }
  func.func @transform_3(%arg0: i32, %arg1: i32) -> (i32, i32, i32) {
    %c0_i32 = arith.constant 0 : i32
    %c0_i32_0 = arith.constant 0 : i32
    return %arg0, %arg1, %c0_i32 : i32, i32, i32
  }
}

</mosaic_0001>

<llo_original>
// kernel: depthwise_conv2d_subsampling.2
$region0: #{depthwise_conv2d_subsampling.2}
  #allocation0 [shape = 'u32[]', space=smem, size = 0x4, offset = 0x4, fixed_abs, tag = 'smem constant byte address 0x4 - core index']
  #allocation1 [shape = 'u32[144,128]{1,0:T(1,128)}', space=vmem, size = 0x12000, scoped, tag = 'internal scratch']
  %s0 = inlined_call_operand.vmem [shape: f32[2,112,9], index: 0, kind: input, shape index: {}]
  %s1 = inlined_call_operand.vmem [shape: f32[9,128], index: 1, kind: input, shape index: {}]
  %s2 = inlined_call_operand.vmem [shape: f32[1,128], index: 2, kind: input, shape index: {}]
  %s3 = inlined_call_operand.vmem [shape: f32[2,112,128], index: 3, kind: output, shape index: {}]
  %s4 = sld [smem:[#allocation0]]
  $region45: #{depthwise_conv2d_subsampling.2} parent=0
    _
  %s6 = ssub.s32 1, %s4
  %s7 = scalar_select 0, %s6, %s4
  loop: start=0, step=1, limit=4
  $region2: #{depthwise_conv2d_subsampling.2} parent=0 // loop_pre_header
    _
  $region3: #{depthwise_conv2d_subsampling.2} parent=0 // loop_header
    %s9 = sphi 0, %s13
    %p10 = scmp.ge.s32.totalorder %s9, 4
    %s16 = sphi 0, %s28
    %s17 = sphi 0, %s24
    %s18 = sphi 0, %s16
    %s19 = sphi 0, %s17
    %s20 = sphi 0, %s18
    %s21 = sphi 0, %s19
    %s33 = sphi 0, %s35
    %s36 = sphi 0, %s33
    %s37 = sphi 0, %s36
    %s53 = sphi 0, %s37
    %s57 = sphi 0, %s57
    %s59 = sphi 0, %s57
    %s60 = sphi 0, %s59
    %s74 = sphi 0, %s60
    %s78 = sphi 0, %s78
    %s80 = sphi 0, %s78
    %s81 = sphi 0, %s80
    %s95 = sphi 0, %s81
    %s103 = sphi 0, %s105
    %s106 = sphi 0, %s103
    %s107 = sphi 0, %s106
    %s123 = sphi 0, %s107
  $region4: #{depthwise_conv2d_subsampling.2} parent=0 // loop_header_branch
    %12 = sbr.rel (%p10) target = $region8
  $region5: #{depthwise_conv2d_subsampling.2} parent=0 // loop_body
    %s14 = ssub.s32 %s9, 1
    %s15 = ssub.s32 %s9, 2
    %s22 = sadd.s32 1, %s17
    %p23 = scmp.ge.s32.totalorder %s22, 1
    %s24 = scalar_select %p23, 0, %s22
    %s25 = sadd.s32 1, %s16
    %s26 = scalar_select %p23, %s25, %s16
    %p27 = scmp.ge.s32.totalorder %s26, 2
    %s28 = scalar_select %p27, 0, %s26
    %s29 = ssub.s32 %s16, %s28
    %s30 = ssub.s32 %s17, %s24
    %s31 = sor.u32 %s29, %s30
    %p32 = scmp.eq.s32.totalorder %s31, 0
    %s34 = sadd.s32 %s33, 1
    %s35 = scalar_select %p32, %s33, %s34
    %p38 = pneg %p32
    %p39 = scmp.eq.s32.totalorder %s9, 1
    %p40 = por %p38, %p39
    %p41 = scmp.ne.s32.totalorder %s33, %s36
    %p42 = scmp.eq.s32.totalorder %s9, 0
    %p43 = por %p41, %p42
    %p44 = scmp.ne.s32.totalorder %s33, %s36
    %p45 = scmp.eq.s32.totalorder %s14, 1
    %p46 = por %p44, %p45
    %p47 = scmp.ne.s32.totalorder %s36, %s37
    %p48 = scmp.eq.s32.totalorder %s14, 0
    %p49 = por %p47, %p48
    %p50 = scmp.ne.s32.totalorder %s36, %s37
    %p51 = scmp.eq.s32.totalorder %s15, 1
    %p52 = por %p50, %p51
    %p54 = scmp.ne.s32.totalorder %s37, %s53
    %p55 = scmp.eq.s32.totalorder %s15, 0
    %p56 = por %p54, %p55
    %s58 = sadd.s32 %s57, 1
    %p61 = scmp.eq.s32.totalorder %s9, 1
    %p62 = scmp.ne.s32.totalorder %s57, %s59
    %p63 = scmp.eq.s32.totalorder %s9, 0
    %p64 = por %p62, %p63
    %p65 = scmp.ne.s32.totalorder %s57, %s59
    %p66 = scmp.eq.s32.totalorder %s14, 1
    %p67 = por %p65, %p66
    %p68 = scmp.ne.s32.totalorder %s59, %s60
    %p69 = scmp.eq.s32.totalorder %s14, 0
    %p70 = por %p68, %p69
    %p71 = scmp.ne.s32.totalorder %s59, %s60
    %p72 = scmp.eq.s32.totalorder %s15, 1
    %p73 = por %p71, %p72
    %p75 = scmp.ne.s32.totalorder %s60, %s74
    %p76 = scmp.eq.s32.totalorder %s15, 0
    %p77 = por %p75, %p76
    %s79 = sadd.s32 %s78, 1
    %p82 = scmp.eq.s32.totalorder %s9, 1
    %p83 = scmp.ne.s32.totalorder %s78, %s80
    %p84 = scmp.eq.s32.totalorder %s9, 0
    %p85 = por %p83, %p84
    %p86 = scmp.ne.s32.totalorder %s78, %s80
    %p87 = scmp.eq.s32.totalorder %s14, 1
    %p88 = por %p86, %p87
    %p89 = scmp.ne.s32.totalorder %s80, %s81
    %p90 = scmp.eq.s32.totalorder %s14, 0
    %p91 = por %p89, %p90
    %p92 = scmp.ne.s32.totalorder %s80, %s81
    %p93 = scmp.eq.s32.totalorder %s15, 1
    %p94 = por %p92, %p93
    %p96 = scmp.ne.s32.totalorder %s81, %s95
    %p97 = scmp.eq.s32.totalorder %s15, 0
    %p98 = por %p96, %p97
    %s99 = ssub.s32 %s16, %s28
    %s100 = ssub.s32 %s17, %s24
    %s101 = sor.u32 %s99, %s100
    %p102 = scmp.eq.s32.totalorder %s101, 0
    %s104 = sadd.s32 %s103, 1
    %s105 = scalar_select %p102, %s103, %s104
    %p108 = pneg %p102
    %p109 = scmp.eq.s32.totalorder %s9, 1
    %p110 = por %p108, %p109
    %p111 = scmp.ne.s32.totalorder %s103, %s106
    %p112 = scmp.eq.s32.totalorder %s9, 0
    %p113 = por %p111, %p112
    %p114 = scmp.ne.s32.totalorder %s103, %s106
    %p115 = scmp.eq.s32.totalorder %s14, 1
    %p116 = por %p114, %p115
    %p117 = scmp.ne.s32.totalorder %s106, %s107
    %p118 = scmp.eq.s32.totalorder %s14, 0
    %p119 = por %p117, %p118
    %p120 = scmp.ne.s32.totalorder %s106, %s107
    %p121 = scmp.eq.s32.totalorder %s15, 1
    %p122 = por %p120, %p121
    %p124 = scmp.ne.s32.totalorder %s107, %s123
    %p125 = scmp.eq.s32.totalorder %s15, 0
    %p126 = por %p124, %p125
    %p127 = scmp.le.s32.totalorder 1, %s9
    %p128 = scmp.lt.s32.totalorder %s9, 3
    %p129 = pnand %p127, %p128
    %p130 = pneg %p129
    // Predicated region
    $region9: #{depthwise_conv2d_subsampling.2} parent=5 // pred_check
      _
    $region10: #{depthwise_conv2d_subsampling.2} parent=5 // pred_check_branch
      %132 = sbr.rel (%p129) target = $region12
    $region11: #{depthwise_conv2d_subsampling.2} parent=5 // pred_region
      %s133 = ssub.s32 %s9, 1
      // Predicated region
      $region13: #{depthwise_conv2d_subsampling.2} parent=11 // pred_check
        %p134 = pneg %p70
      $region14: #{depthwise_conv2d_subsampling.2} parent=11 // pred_check_branch
        %136 = sbr.rel (%p134) target = $region16
      $region15: #{depthwise_conv2d_subsampling.2} parent=11 // pred_region
        _
      $region16: #{depthwise_conv2d_subsampling.2} parent=11 // pred_fallthru
        _
      // Predicated region
      $region17: #{depthwise_conv2d_subsampling.2} parent=11 // pred_check
        %p137 = pneg %p91
      $region18: #{depthwise_conv2d_subsampling.2} parent=11 // pred_check_branch
        %139 = sbr.rel (%p137) target = $region20
      $region19: #{depthwise_conv2d_subsampling.2} parent=11 // pred_region
        _
      $region20: #{depthwise_conv2d_subsampling.2} parent=11 // pred_fallthru
        _
    $region12: #{depthwise_conv2d_subsampling.2} parent=5 // pred_fallthru
      _
    %p140 = scmp.lt.s32.totalorder %s9, 2
    // Predicated region
    $region21: #{depthwise_conv2d_subsampling.2} parent=5 // pred_check
      %p141 = pneg %p140
    $region22: #{depthwise_conv2d_subsampling.2} parent=5 // pred_check_branch
      %143 = sbr.rel (%p141) target = $region24
    $region23: #{depthwise_conv2d_subsampling.2} parent=5 // pred_region
      // Predicated region
      $region25: #{depthwise_conv2d_subsampling.2} parent=23 // pred_check
        %p144 = pneg %p43
      $region26: #{depthwise_conv2d_subsampling.2} parent=23 // pred_check_branch
        %146 = sbr.rel (%p144) target = $region28
      $region27: #{depthwise_conv2d_subsampling.2} parent=23 // pred_region
        %s147 = smul.u32 14, %s17
        %p148 = scmp.lt.s32.totalorder %s16, 1
        %s149 = scalar_select %p148, %s16, 1
        %p150 = scmp.lt.s32.totalorder %s147, 13
        %s151 = scalar_select %p150, %s147, 13
        %s152 = smul.addr %s149, 14
        %s153 = sadd.s32 %s151, %s152
        %s154 = smul.addr %s153, 8
        %s155 = scalar_lea.vmem %s0, %s154
        %s156 = smul.u32 14, %s17
      $region28: #{depthwise_conv2d_subsampling.2} parent=23 // pred_fallthru
        _
    $region24: #{depthwise_conv2d_subsampling.2} parent=5 // pred_fallthru
      _
    %p157 = scmp.le.s32.totalorder 1, %s9
    %p158 = scmp.lt.s32.totalorder %s9, 3
    %p159 = pnand %p157, %p158
    %p160 = pneg %p159
    // Predicated region
    $region29: #{depthwise_conv2d_subsampling.2} parent=5 // pred_check
      _
    $region30: #{depthwise_conv2d_subsampling.2} parent=5 // pred_check_branch
      %162 = sbr.rel (%p159) target = $region32
    $region31: #{depthwise_conv2d_subsampling.2} parent=5 // pred_region
      %s163 = ssub.s32 %s9, 1
      %s164 = smul.u32 14, %s19
      %p165 = scmp.lt.s32.totalorder %s18, 1
      %s166 = scalar_select %p165, %s18, 1
      %p167 = scmp.lt.s32.totalorder %s164, 13
      %s168 = scalar_select %p167, %s164, 13
      %s169 = smul.addr %s166, 14
      %s170 = sadd.s32 %s168, %s169
      %s171 = smul.addr %s170, 8
      %s172 = scalar_lea.vmem %s0, %s171
      %p173 = pneg %p49
      %p174 = pneg %p46
      %p175 = pneg %p70
      %p176 = pneg %p67
      %p177 = pneg %p91
      %p178 = pneg %p88
      %p179 = pneg %p119
      %p180 = pneg %p116
      %s181 = smul.u32 14, %s19
      %p182 = scmp.lt.s32.totalorder %s18, 1
      %s183 = scalar_select %p182, %s18, 1
      %p184 = scmp.lt.s32.totalorder %s181, 13
      %s185 = scalar_select %p184, %s181, 13
      %s186 = smul.addr %s183, 14
      %s187 = sadd.s32 %s185, %s186
      %s188 = smul.addr %s187, 8
      %s189 = scalar_lea.vmem %s3, %s188
      %s190 = smul.u32 14, %s19
      %p191 = scmp.lt.s32.totalorder %s18, 1
      %s192 = scalar_select %p191, %s18, 1
      %p193 = scmp.lt.s32.totalorder %s190, 13
      %s194 = scalar_select %p193, %s190, 13
      %s195 = smul.addr %s192, 14
      %s196 = sadd.s32 %s194, %s195
      %s197 = smul.addr %s196, 8
      %s198 = scalar_lea.vmem %s0, %s197
      %s199 = smul.u32 14, %s19
      %s200 = smul.u32 14, %s19
      %p201 = scmp.lt.s32.totalorder %s18, 1
      %s202 = scalar_select %p201, %s18, 1
      %p203 = scmp.lt.s32.totalorder %s200, 13
      %s204 = scalar_select %p203, %s200, 13
      %s205 = smul.addr %s202, 14
      %s206 = sadd.s32 %s204, %s205
      %s207 = smul.addr %s206, 8
      %s208 = scalar_lea.vmem %s3, %s207
      %s209 = smul.u32 14, %s19
      %v210 = vld [vmem:[%s198] sm:$0xff]
      %v211 = vld [vmem:[%s198 + $0x8] sm:$0xff]
      %v212 = vld [vmem:[%s198 + $0x10] sm:$0xff]
      %v213 = vld [vmem:[%s198 + $0x18] sm:$0xff]
      %v214 = vld [vmem:[%s198 + $0x20] sm:$0xff]
      %v215 = vld [vmem:[%s198 + $0x28] sm:$0xff]
      %v216 = vld [vmem:[%s198 + $0x30] sm:$0xff]
      %v217 = vld [vmem:[%s198 + $0x38] sm:$0xff]
      %v218 = vld [vmem:[%s198 + $0x40] sm:$0xff]
      %v219 = vld [vmem:[%s198 + $0x48] sm:$0xff]
      %v220 = vld [vmem:[%s198 + $0x50] sm:$0xff]
      %v221 = vld [vmem:[%s198 + $0x58] sm:$0xff]
      %v222 = vld [vmem:[%s198 + $0x60] sm:$0xff]
      %v223 = vld [vmem:[%s198 + $0x68] sm:$0xff]
      %v224 = vld [vmem:[%s1] sm:$0xff]
      %v225 = vld [vmem:[%s1 + $0x8] sm:$0x1]
      %v226 = vld [vmem:[%s2] sm:$0x1]
      %v228 = vlaneseq
      %v229 = vshrl.u32 %v228, 7
      %v230 = vsub.s32 0, %v229
      %v231 = vrot.slane %v226, %v230
      %vm233 = vcmask 72704
      %v235 = vsel %vm233, %v210, 0
      %v238 = vsel %vm233, %v211, 0
      %v241 = vsel %vm233, %v212, 0
      %v244 = vsel %vm233, %v213, 0
      %v247 = vsel %vm233, %v214, 0
      %v250 = vsel %vm233, %v215, 0
      %v253 = vsel %vm233, %v216, 0
      %v256 = vsel %vm233, %v217, 0
      %v259 = vsel %vm233, %v218, 0
      %v262 = vsel %vm233, %v219, 0
      %v265 = vsel %vm233, %v220, 0
      %v268 = vsel %vm233, %v221, 0
      %v271 = vsel %vm233, %v222, 0
      %v274 = vsel %vm233, %v223, 0
      %vm276 = vcmask 1040384
      %v278 = vsel %vm276, %v225, 0
      %280 = vmatprep.subr.mxu0 0.0
      %281 = vmatpush1.msra.mxu0 0.0
      %282 = vmatprep.subr.mxu0 0.0
      %283 = vmatpush1.msra.mxu0 0.0
      %284 = vmatprep.subr.mxu0 0.0
      %285 = vmatpush1.msra.mxu0 0.0
      %286 = vmatprep.subr.mxu0 0.0
      %287 = vmatpush1.msra.mxu0 0.0
      %288 = vmatprep.subr.mxu0 0.0
      %289 = vmatpush1.msra.mxu0 0.0
      %290 = vmatprep.subr.mxu0 0.0
      %291 = vmatpush1.msra.mxu0 0.0
      %292 = vmatprep.subr.mxu0 0.0
      %293 = vmatpush1.msra.mxu0 0.0
      %294 = vmatprep.subr.mxu0 0.0
      %295 = vmatpush1.msra.mxu0 0.0
      %296 = vmatprep.subr.mxu0 0.0
      %297 = vmatpush1.msra.mxu0 0.0
      %298 = vmatprep.subr.mxu0 0.0
      %299 = vmatpush1.msra.mxu0 0.0
      %300 = vmatprep.subr.mxu0 0.0
      %301 = vmatpush1.msra.mxu0 0.0
      %302 = vmatprep.subr.mxu0 0.0
      %303 = vmatpush1.msra.mxu0 0.0
      %304 = vmatprep.subr.mxu0 0.0
      %305 = vmatpush1.msra.mxu0 0.0
      %306 = vmatprep.subr.mxu0 0.0
      %307 = vmatpush1.msra.mxu0 0.0
      %308 = vmatprep.subr.mxu0 0.0
      %309 = vmatpush1.msra.mxu0 %v278
      %310 = vmatprep.subr.mxu0 0.0
      %311 = vmatpush1.msra.mxu0 %v224
      %312 = vmatprep.subr.mxu0 0.0
      %313 = vmatpush2.msra.mxu0 0.0
      %314 = vmatprep.subr.mxu0 0.0
      %315 = vmatpush2.msra.mxu0 0.0
      %316 = vmatprep.subr.mxu0 0.0
      %317 = vmatpush2.msra.mxu0 0.0
      %318 = vmatprep.subr.mxu0 0.0
      %319 = vmatpush2.msra.mxu0 0.0
      %320 = vmatprep.subr.mxu0 0.0
      %321 = vmatpush2.msra.mxu0 0.0
      %322 = vmatprep.subr.mxu0 0.0
      %323 = vmatpush2.msra.mxu0 0.0
      %324 = vmatprep.subr.mxu0 0.0
      %325 = vmatpush2.msra.mxu0 0.0
      %326 = vmatprep.subr.mxu0 0.0
      %327 = vmatpush2.msra.mxu0 0.0
      %328 = vmatprep.subr.mxu0 0.0
      %329 = vmatpush2.msra.mxu0 0.0
      %330 = vmatprep.subr.mxu0 0.0
      %331 = vmatpush2.msra.mxu0 0.0
      %332 = vmatprep.subr.mxu0 0.0
      %333 = vmatpush2.msra.mxu0 0.0
      %334 = vmatprep.subr.mxu0 0.0
      %335 = vmatpush2.msra.mxu0 0.0
      %336 = vmatprep.subr.mxu0 0.0
      %337 = vmatpush2.msra.mxu0 0.0
      %338 = vmatprep.subr.mxu0 0.0
      %339 = vmatpush2.msra.mxu0 0.0
      %340 = vmatprep.subr.mxu0 0.0
      %341 = vmatpush2.msra.mxu0 0.0
      %342 = vmatprep.subr.mxu0 0.0
      %343 = vmatpush2.msra.mxu0 0.0
      %344 = vmatprep.mubr.f32.mxu0 0.0
      %345 = vmatmul.mubr.f32.gmra.mxu0 %v235
      %v346 = vpop.f32.mrf.mxu0
      %v347 = vadd.f32 %v231, %v346
      %v348 = vpop.f32.mrf.mxu0
      %349 = vmatprep.mubr.f32.mxu0 0.0
      %350 = vmatmul.mubr.f32.gmra.mxu0 %v238
      %v351 = vpop.f32.mrf.mxu0
      %v352 = vadd.f32 %v231, %v351
      %v353 = vpop.f32.mrf.mxu0
      %354 = vmatprep.mubr.f32.mxu0 0.0
      %355 = vmatmul.mubr.f32.gmra.mxu0 %v241
      %v356 = vpop.f32.mrf.mxu0
      %v357 = vadd.f32 %v231, %v356
      %v358 = vpop.f32.mrf.mxu0
      %359 = vmatprep.mubr.f32.mxu0 0.0
      %360 = vmatmul.mubr.f32.gmra.mxu0 %v244
      %v361 = vpop.f32.mrf.mxu0
      %v362 = vadd.f32 %v231, %v361
      %v363 = vpop.f32.mrf.mxu0
      %364 = vmatprep.mubr.f32.mxu0 0.0
      %365 = vmatmul.mubr.f32.gmra.mxu0 %v247
      %v366 = vpop.f32.mrf.mxu0
      %v367 = vadd.f32 %v231, %v366
      %v368 = vpop.f32.mrf.mxu0
      %369 = vmatprep.mubr.f32.mxu0 0.0
      %370 = vmatmul.mubr.f32.gmra.mxu0 %v250
      %v371 = vpop.f32.mrf.mxu0
      %v372 = vadd.f32 %v231, %v371
      %v373 = vpop.f32.mrf.mxu0
      %374 = vmatprep.mubr.f32.mxu0 0.0
      %375 = vmatmul.mubr.f32.gmra.mxu0 %v253
      %v376 = vpop.f32.mrf.mxu0
      %v377 = vadd.f32 %v231, %v376
      %v378 = vpop.f32.mrf.mxu0
      %379 = vmatprep.mubr.f32.mxu0 0.0
      %380 = vmatmul.mubr.f32.gmra.mxu0 %v256
      %v381 = vpop.f32.mrf.mxu0
      %v382 = vadd.f32 %v231, %v381
      %v383 = vpop.f32.mrf.mxu0
      %384 = vmatprep.mubr.f32.mxu0 0.0
      %385 = vmatmul.mubr.f32.gmra.mxu0 %v259
      %v386 = vpop.f32.mrf.mxu0
      %v387 = vadd.f32 %v231, %v386
      %v388 = vpop.f32.mrf.mxu0
      %389 = vmatprep.mubr.f32.mxu0 0.0
      %390 = vmatmul.mubr.f32.gmra.mxu0 %v262
      %v391 = vpop.f32.mrf.mxu0
      %v392 = vadd.f32 %v231, %v391
      %v393 = vpop.f32.mrf.mxu0
      %394 = vmatprep.mubr.f32.mxu0 0.0
      %395 = vmatmul.mubr.f32.gmra.mxu0 %v265
      %v396 = vpop.f32.mrf.mxu0
      %v397 = vadd.f32 %v231, %v396
      %v398 = vpop.f32.mrf.mxu0
      %399 = vmatprep.mubr.f32.mxu0 0.0
      %400 = vmatmul.mubr.f32.gmra.mxu0 %v268
      %v401 = vpop.f32.mrf.mxu0
      %v402 = vadd.f32 %v231, %v401
      %v403 = vpop.f32.mrf.mxu0
      %404 = vmatprep.mubr.f32.mxu0 0.0
      %405 = vmatmul.mubr.f32.gmra.mxu0 %v271
      %v406 = vpop.f32.mrf.mxu0
      %v407 = vadd.f32 %v231, %v406
      %v408 = vpop.f32.mrf.mxu0
      %409 = vmatprep.mubr.f32.mxu0 0.0
      %410 = vmatmul.mubr.f32.gmra.mxu0 %v274
      %v411 = vpop.f32.mrf.mxu0
      %v412 = vadd.f32 %v231, %v411
      %v413 = vpop.f32.mrf.mxu0
      %414 = vdwg.mxu0
      %v415 = vmax.f32 %v347, 0.0
      %v416 = vmax.f32 %v352, 0.0
      %v417 = vmax.f32 %v357, 0.0
      %v418 = vmax.f32 %v362, 0.0
      %v419 = vmax.f32 %v367, 0.0
      %v420 = vmax.f32 %v372, 0.0
      %v421 = vmax.f32 %v377, 0.0
      %v422 = vmax.f32 %v382, 0.0
      %v423 = vmax.f32 %v387, 0.0
      %v424 = vmax.f32 %v392, 0.0
      %v425 = vmax.f32 %v397, 0.0
      %v426 = vmax.f32 %v402, 0.0
      %v427 = vmax.f32 %v407, 0.0
      %v428 = vmax.f32 %v412, 0.0
      %429 = vst [vmem:[%s208] sm:$0xff] %v415
      %430 = vst [vmem:[%s208 + $0x8] sm:$0xff] %v416
      %431 = vst [vmem:[%s208 + $0x10] sm:$0xff] %v417
      %432 = vst [vmem:[%s208 + $0x18] sm:$0xff] %v418
      %433 = vst [vmem:[%s208 + $0x20] sm:$0xff] %v419
      %434 = vst [vmem:[%s208 + $0x28] sm:$0xff] %v420
      %435 = vst [vmem:[%s208 + $0x30] sm:$0xff] %v421
      %436 = vst [vmem:[%s208 + $0x38] sm:$0xff] %v422
      %437 = vst [vmem:[%s208 + $0x40] sm:$0xff] %v423
      %438 = vst [vmem:[%s208 + $0x48] sm:$0xff] %v424
      %439 = vst [vmem:[%s208 + $0x50] sm:$0xff] %v425
      %440 = vst [vmem:[%s208 + $0x58] sm:$0xff] %v426
      %441 = vst [vmem:[%s208 + $0x60] sm:$0xff] %v427
      %442 = vst [vmem:[%s208 + $0x68] sm:$0xff] %v428
      %s443 = smul.u32 14, %s19
      %p444 = scmp.lt.s32.totalorder %s18, 1
      %s445 = scalar_select %p444, %s18, 1
      %p446 = scmp.lt.s32.totalorder %s443, 13
      %s447 = scalar_select %p446, %s443, 13
      %s448 = smul.addr %s445, 14
      %s449 = sadd.s32 %s447, %s448
      %s450 = smul.addr %s449, 8
      %s451 = scalar_lea.vmem %s3, %s450
      // Predicated region
      $region33: #{depthwise_conv2d_subsampling.2} parent=31 // pred_check
        %p452 = pneg %p116
      $region34: #{depthwise_conv2d_subsampling.2} parent=31 // pred_check_branch
        %454 = sbr.rel (%p452) target = $region36
      $region35: #{depthwise_conv2d_subsampling.2} parent=31 // pred_region
        %s455 = smul.u32 14, %s19
      $region36: #{depthwise_conv2d_subsampling.2} parent=31 // pred_fallthru
        _
    $region32: #{depthwise_conv2d_subsampling.2} parent=5 // pred_fallthru
      _
    %p456 = scmp.le.s32.totalorder 2, %s9
    // Predicated region
    $region37: #{depthwise_conv2d_subsampling.2} parent=5 // pred_check
      %p457 = pneg %p456
    $region38: #{depthwise_conv2d_subsampling.2} parent=5 // pred_check_branch
      %459 = sbr.rel (%p457) target = $region40
    $region39: #{depthwise_conv2d_subsampling.2} parent=5 // pred_region
      %s460 = ssub.s32 %s9, 2
      // Predicated region
      $region41: #{depthwise_conv2d_subsampling.2} parent=39 // pred_check
        %p461 = pneg %p122
      $region42: #{depthwise_conv2d_subsampling.2} parent=39 // pred_check_branch
        %463 = sbr.rel (%p461) target = $region44
      $region43: #{depthwise_conv2d_subsampling.2} parent=39 // pred_region
        %s464 = smul.u32 14, %s21
        %p465 = scmp.lt.s32.totalorder %s20, 1
        %s466 = scalar_select %p465, %s20, 1
        %p467 = scmp.lt.s32.totalorder %s464, 13
        %s468 = scalar_select %p467, %s464, 13
        %s469 = smul.addr %s466, 14
        %s470 = sadd.s32 %s468, %s469
        %s471 = smul.addr %s470, 8
        %s472 = scalar_lea.vmem %s3, %s471
      $region44: #{depthwise_conv2d_subsampling.2} parent=39 // pred_fallthru
        _
    $region40: #{depthwise_conv2d_subsampling.2} parent=5 // pred_fallthru
      _
  $region6: #{depthwise_conv2d_subsampling.2} parent=0 // loop_footer
    %s13 = sadd.s32 1, %s9
  $region7: #{depthwise_conv2d_subsampling.2} parent=0 // loop_footer_branch
    %8 = sbr.rel target = $region3
  $region8: #{depthwise_conv2d_subsampling.2} parent=0 // loop_exit
    _

// kernel: depthwise_conv2d_subsampling.3
$region0: #{depthwise_conv2d_subsampling.3}
  #allocation0 [shape = 'u32[]', space=smem, size = 0x4, offset = 0x4, fixed_abs, tag = 'smem constant byte address 0x4 - core index']
  #allocation1 [shape = 'u32[144,128]{1,0:T(1,128)}', space=vmem, size = 0x12000, scoped, tag = 'internal scratch']
  %s0 = inlined_call_operand.vmem [shape: f32[2,9,24,128], index: 0, kind: input, shape index: {}]
  %s1 = inlined_call_operand.vmem [shape: f32[9,128], index: 1, kind: input, shape index: {}]
  %s2 = inlined_call_operand.vmem [shape: f32[1,128], index: 2, kind: input, shape index: {}]
  %s3 = inlined_call_operand.vmem [shape: f32[2,24,128], index: 3, kind: output, shape index: {}]
  %s4 = sld [smem:[#allocation0]]
  $region45: #{depthwise_conv2d_subsampling.3} parent=0
    _
  %s6 = ssub.s32 1, %s4
  %s7 = scalar_select 0, %s6, %s4
  loop: start=0, step=1, limit=4
  $region2: #{depthwise_conv2d_subsampling.3} parent=0 // loop_pre_header
    _
  $region3: #{depthwise_conv2d_subsampling.3} parent=0 // loop_header
    %s9 = sphi 0, %s13
    %p10 = scmp.ge.s32.totalorder %s9, 4
    %s16 = sphi 0, %s28
    %s17 = sphi 0, %s24
    %s18 = sphi 0, %s16
    %s19 = sphi 0, %s17
    %s20 = sphi 0, %s18
    %s21 = sphi 0, %s19
    %s33 = sphi 0, %s35
    %s36 = sphi 0, %s33
    %s37 = sphi 0, %s36
    %s53 = sphi 0, %s37
    %s57 = sphi 0, %s57
    %s59 = sphi 0, %s57
    %s60 = sphi 0, %s59
    %s74 = sphi 0, %s60
    %s78 = sphi 0, %s78
    %s80 = sphi 0, %s78
    %s81 = sphi 0, %s80
    %s95 = sphi 0, %s81
    %s103 = sphi 0, %s105
    %s106 = sphi 0, %s103
    %s107 = sphi 0, %s106
    %s123 = sphi 0, %s107
  $region4: #{depthwise_conv2d_subsampling.3} parent=0 // loop_header_branch
    %12 = sbr.rel (%p10) target = $region8
  $region5: #{depthwise_conv2d_subsampling.3} parent=0 // loop_body
    %s14 = ssub.s32 %s9, 1
    %s15 = ssub.s32 %s9, 2
    %s22 = sadd.s32 1, %s17
    %p23 = scmp.ge.s32.totalorder %s22, 1
    %s24 = scalar_select %p23, 0, %s22
    %s25 = sadd.s32 1, %s16
    %s26 = scalar_select %p23, %s25, %s16
    %p27 = scmp.ge.s32.totalorder %s26, 2
    %s28 = scalar_select %p27, 0, %s26
    %s29 = ssub.s32 %s16, %s28
    %s30 = ssub.s32 %s17, %s24
    %s31 = sor.u32 %s29, %s30
    %p32 = scmp.eq.s32.totalorder %s31, 0
    %s34 = sadd.s32 %s33, 1
    %s35 = scalar_select %p32, %s33, %s34
    %p38 = pneg %p32
    %p39 = scmp.eq.s32.totalorder %s9, 1
    %p40 = por %p38, %p39
    %p41 = scmp.ne.s32.totalorder %s33, %s36
    %p42 = scmp.eq.s32.totalorder %s9, 0
    %p43 = por %p41, %p42
    %p44 = scmp.ne.s32.totalorder %s33, %s36
    %p45 = scmp.eq.s32.totalorder %s14, 1
    %p46 = por %p44, %p45
    %p47 = scmp.ne.s32.totalorder %s36, %s37
    %p48 = scmp.eq.s32.totalorder %s14, 0
    %p49 = por %p47, %p48
    %p50 = scmp.ne.s32.totalorder %s36, %s37
    %p51 = scmp.eq.s32.totalorder %s15, 1
    %p52 = por %p50, %p51
    %p54 = scmp.ne.s32.totalorder %s37, %s53
    %p55 = scmp.eq.s32.totalorder %s15, 0
    %p56 = por %p54, %p55
    %s58 = sadd.s32 %s57, 1
    %p61 = scmp.eq.s32.totalorder %s9, 1
    %p62 = scmp.ne.s32.totalorder %s57, %s59
    %p63 = scmp.eq.s32.totalorder %s9, 0
    %p64 = por %p62, %p63
    %p65 = scmp.ne.s32.totalorder %s57, %s59
    %p66 = scmp.eq.s32.totalorder %s14, 1
    %p67 = por %p65, %p66
    %p68 = scmp.ne.s32.totalorder %s59, %s60
    %p69 = scmp.eq.s32.totalorder %s14, 0
    %p70 = por %p68, %p69
    %p71 = scmp.ne.s32.totalorder %s59, %s60
    %p72 = scmp.eq.s32.totalorder %s15, 1
    %p73 = por %p71, %p72
    %p75 = scmp.ne.s32.totalorder %s60, %s74
    %p76 = scmp.eq.s32.totalorder %s15, 0
    %p77 = por %p75, %p76
    %s79 = sadd.s32 %s78, 1
    %p82 = scmp.eq.s32.totalorder %s9, 1
    %p83 = scmp.ne.s32.totalorder %s78, %s80
    %p84 = scmp.eq.s32.totalorder %s9, 0
    %p85 = por %p83, %p84
    %p86 = scmp.ne.s32.totalorder %s78, %s80
    %p87 = scmp.eq.s32.totalorder %s14, 1
    %p88 = por %p86, %p87
    %p89 = scmp.ne.s32.totalorder %s80, %s81
    %p90 = scmp.eq.s32.totalorder %s14, 0
    %p91 = por %p89, %p90
    %p92 = scmp.ne.s32.totalorder %s80, %s81
    %p93 = scmp.eq.s32.totalorder %s15, 1
    %p94 = por %p92, %p93
    %p96 = scmp.ne.s32.totalorder %s81, %s95
    %p97 = scmp.eq.s32.totalorder %s15, 0
    %p98 = por %p96, %p97
    %s99 = ssub.s32 %s16, %s28
    %s100 = ssub.s32 %s17, %s24
    %s101 = sor.u32 %s99, %s100
    %p102 = scmp.eq.s32.totalorder %s101, 0
    %s104 = sadd.s32 %s103, 1
    %s105 = scalar_select %p102, %s103, %s104
    %p108 = pneg %p102
    %p109 = scmp.eq.s32.totalorder %s9, 1
    %p110 = por %p108, %p109
    %p111 = scmp.ne.s32.totalorder %s103, %s106
    %p112 = scmp.eq.s32.totalorder %s9, 0
    %p113 = por %p111, %p112
    %p114 = scmp.ne.s32.totalorder %s103, %s106
    %p115 = scmp.eq.s32.totalorder %s14, 1
    %p116 = por %p114, %p115
    %p117 = scmp.ne.s32.totalorder %s106, %s107
    %p118 = scmp.eq.s32.totalorder %s14, 0
    %p119 = por %p117, %p118
    %p120 = scmp.ne.s32.totalorder %s106, %s107
    %p121 = scmp.eq.s32.totalorder %s15, 1
    %p122 = por %p120, %p121
    %p124 = scmp.ne.s32.totalorder %s107, %s123
    %p125 = scmp.eq.s32.totalorder %s15, 0
    %p126 = por %p124, %p125
    %p127 = scmp.le.s32.totalorder 1, %s9
    %p128 = scmp.lt.s32.totalorder %s9, 3
    %p129 = pnand %p127, %p128
    %p130 = pneg %p129
    // Predicated region
    $region9: #{depthwise_conv2d_subsampling.3} parent=5 // pred_check
      _
    $region10: #{depthwise_conv2d_subsampling.3} parent=5 // pred_check_branch
      %132 = sbr.rel (%p129) target = $region12
    $region11: #{depthwise_conv2d_subsampling.3} parent=5 // pred_region
      %s133 = ssub.s32 %s9, 1
      // Predicated region
      $region13: #{depthwise_conv2d_subsampling.3} parent=11 // pred_check
        %p134 = pneg %p70
      $region14: #{depthwise_conv2d_subsampling.3} parent=11 // pred_check_branch
        %136 = sbr.rel (%p134) target = $region16
      $region15: #{depthwise_conv2d_subsampling.3} parent=11 // pred_region
        _
      $region16: #{depthwise_conv2d_subsampling.3} parent=11 // pred_fallthru
        _
      // Predicated region
      $region17: #{depthwise_conv2d_subsampling.3} parent=11 // pred_check
        %p137 = pneg %p91
      $region18: #{depthwise_conv2d_subsampling.3} parent=11 // pred_check_branch
        %139 = sbr.rel (%p137) target = $region20
      $region19: #{depthwise_conv2d_subsampling.3} parent=11 // pred_region
        _
      $region20: #{depthwise_conv2d_subsampling.3} parent=11 // pred_fallthru
        _
    $region12: #{depthwise_conv2d_subsampling.3} parent=5 // pred_fallthru
      _
    %p140 = scmp.lt.s32.totalorder %s9, 2
    // Predicated region
    $region21: #{depthwise_conv2d_subsampling.3} parent=5 // pred_check
      %p141 = pneg %p140
    $region22: #{depthwise_conv2d_subsampling.3} parent=5 // pred_check_branch
      %143 = sbr.rel (%p141) target = $region24
    $region23: #{depthwise_conv2d_subsampling.3} parent=5 // pred_region
      // Predicated region
      $region25: #{depthwise_conv2d_subsampling.3} parent=23 // pred_check
        %p144 = pneg %p43
      $region26: #{depthwise_conv2d_subsampling.3} parent=23 // pred_check_branch
        %146 = sbr.rel (%p144) target = $region28
      $region27: #{depthwise_conv2d_subsampling.3} parent=23 // pred_region
        %s147 = smul.u32 3, %s17
        %p148 = scmp.lt.s32.totalorder %s16, 1
        %s149 = scalar_select %p148, %s16, 1
        %p150 = scmp.lt.s32.totalorder %s147, 2
        %s151 = scalar_select %p150, %s147, 2
        %s152 = smul.addr %s149, 27
        %s153 = sadd.s32 %s151, %s152
        %s154 = smul.addr %s153, 8
        %s155 = scalar_lea.vmem %s0, %s154
        %s156 = smul.u32 3, %s17
      $region28: #{depthwise_conv2d_subsampling.3} parent=23 // pred_fallthru
        _
    $region24: #{depthwise_conv2d_subsampling.3} parent=5 // pred_fallthru
      _
    %p157 = scmp.le.s32.totalorder 1, %s9
    %p158 = scmp.lt.s32.totalorder %s9, 3
    %p159 = pnand %p157, %p158
    %p160 = pneg %p159
    // Predicated region
    $region29: #{depthwise_conv2d_subsampling.3} parent=5 // pred_check
      _
    $region30: #{depthwise_conv2d_subsampling.3} parent=5 // pred_check_branch
      %162 = sbr.rel (%p159) target = $region32
    $region31: #{depthwise_conv2d_subsampling.3} parent=5 // pred_region
      %s163 = ssub.s32 %s9, 1
      %s164 = smul.u32 3, %s19
      %p165 = scmp.lt.s32.totalorder %s18, 1
      %s166 = scalar_select %p165, %s18, 1
      %p167 = scmp.lt.s32.totalorder %s164, 2
      %s168 = scalar_select %p167, %s164, 2
      %s169 = smul.addr %s166, 27
      %s170 = sadd.s32 %s168, %s169
      %s171 = smul.addr %s170, 8
      %s172 = scalar_lea.vmem %s0, %s171
      %p173 = pneg %p49
      %p174 = pneg %p46
      %p175 = pneg %p70
      %p176 = pneg %p67
      %p177 = pneg %p91
      %p178 = pneg %p88
      %p179 = pneg %p119
      %p180 = pneg %p116
      %s181 = smul.u32 3, %s19
      %p182 = scmp.lt.s32.totalorder %s18, 1
      %s183 = scalar_select %p182, %s18, 1
      %p184 = scmp.lt.s32.totalorder %s181, 2
      %s185 = scalar_select %p184, %s181, 2
      %s186 = smul.addr %s183, 3
      %s187 = sadd.s32 %s185, %s186
      %s188 = smul.addr %s187, 8
      %s189 = scalar_lea.vmem %s3, %s188
      %s190 = smul.u32 3, %s19
      %p191 = scmp.lt.s32.totalorder %s18, 1
      %s192 = scalar_select %p191, %s18, 1
      %p193 = scmp.lt.s32.totalorder %s190, 2
      %s194 = scalar_select %p193, %s190, 2
      %s195 = smul.addr %s192, 27
      %s196 = sadd.s32 %s194, %s195
      %s197 = smul.addr %s196, 8
      %s198 = scalar_lea.vmem %s0, %s197
      %s199 = smul.u32 3, %s19
      %s200 = smul.u32 3, %s19
      %p201 = scmp.lt.s32.totalorder %s18, 1
      %s202 = scalar_select %p201, %s18, 1
      %p203 = scmp.lt.s32.totalorder %s200, 2
      %s204 = scalar_select %p203, %s200, 2
      %s205 = smul.addr %s202, 3
      %s206 = sadd.s32 %s204, %s205
      %s207 = smul.addr %s206, 8
      %s208 = scalar_lea.vmem %s3, %s207
      %s209 = smul.u32 3, %s19
      %v210 = vld [vmem:[%s1] sm:$0xff]
      %v211 = vld [vmem:[%s1 + $0x8] sm:$0x1]
      %v212 = vld [vmem:[%s198] sm:$0xff]
      %v213 = vld [vmem:[%s198 + $0x8] sm:$0xff]
      %v214 = vld [vmem:[%s198 + $0x10] sm:$0xff]
      %v215 = vlaneseq
      %v216 = vshrl.u32 %v215, 7
      %v217 = vsub.s32 0, %v216
      %v218 = vrot.slane %v210, %v217
      %v219 = vmul.f32 %v212, %v218
      %v220 = vmul.f32 %v213, %v218
      %v221 = vmul.f32 %v214, %v218
      %s222 = scalar_lea.vmem %s198, 24
      %v223 = vld [vmem:[%s222] sm:$0xff]
      %v224 = vld [vmem:[%s222 + $0x8] sm:$0xff]
      %v225 = vld [vmem:[%s222 + $0x10] sm:$0xff]
      %v226 = vlaneseq
      %v227 = vshrl.u32 %v226, 7
      %v228 = vsub.s32 1, %v227
      %v229 = vrot.slane %v210, %v228
      %v230 = vmul.f32 %v223, %v229
      %v231 = vmul.f32 %v224, %v229
      %v232 = vmul.f32 %v225, %v229
      %v233 = vadd.f32 %v219, %v230
      %v234 = vadd.f32 %v220, %v231
      %v235 = vadd.f32 %v221, %v232
      %s236 = scalar_lea.vmem %s198, 48
      %v237 = vld [vmem:[%s236] sm:$0xff]
      %v238 = vld [vmem:[%s236 + $0x8] sm:$0xff]
      %v239 = vld [vmem:[%s236 + $0x10] sm:$0xff]
      %v240 = vlaneseq
      %v241 = vshrl.u32 %v240, 7
      %v242 = vsub.s32 2, %v241
      %v243 = vrot.slane %v210, %v242
      %v244 = vmul.f32 %v237, %v243
      %v245 = vmul.f32 %v238, %v243
      %v246 = vmul.f32 %v239, %v243
      %v247 = vadd.f32 %v233, %v244
      %v248 = vadd.f32 %v234, %v245
      %v249 = vadd.f32 %v235, %v246
      %s250 = scalar_lea.vmem %s198, 72
      %v251 = vld [vmem:[%s250] sm:$0xff]
      %v252 = vld [vmem:[%s250 + $0x8] sm:$0xff]
      %v253 = vld [vmem:[%s250 + $0x10] sm:$0xff]
      %v254 = vlaneseq
      %v255 = vshrl.u32 %v254, 7
      %v256 = vsub.s32 3, %v255
      %v257 = vrot.slane %v210, %v256
      %v258 = vmul.f32 %v251, %v257
      %v259 = vmul.f32 %v252, %v257
      %v260 = vmul.f32 %v253, %v257
      %v261 = vadd.f32 %v247, %v258
      %v262 = vadd.f32 %v248, %v259
      %v263 = vadd.f32 %v249, %v260
      %s264 = scalar_lea.vmem %s198, 96
      %v265 = vld [vmem:[%s264] sm:$0xff]
      %v266 = vld [vmem:[%s264 + $0x8] sm:$0xff]
      %v267 = vld [vmem:[%s264 + $0x10] sm:$0xff]
      %v268 = vlaneseq
      %v269 = vshrl.u32 %v268, 7
      %v270 = vsub.s32 4, %v269
      %v271 = vrot.slane %v210, %v270
      %v272 = vmul.f32 %v265, %v271
      %v273 = vmul.f32 %v266, %v271
      %v274 = vmul.f32 %v267, %v271
      %v275 = vadd.f32 %v261, %v272
      %v276 = vadd.f32 %v262, %v273
      %v277 = vadd.f32 %v263, %v274
      %s278 = scalar_lea.vmem %s198, 120
      %v279 = vld [vmem:[%s278] sm:$0xff]
      %v280 = vld [vmem:[%s278 + $0x8] sm:$0xff]
      %v281 = vld [vmem:[%s278 + $0x10] sm:$0xff]
      %v282 = vlaneseq
      %v283 = vshrl.u32 %v282, 7
      %v284 = vsub.s32 5, %v283
      %v285 = vrot.slane %v210, %v284
      %v286 = vmul.f32 %v279, %v285
      %v287 = vmul.f32 %v280, %v285
      %v288 = vmul.f32 %v281, %v285
      %v289 = vadd.f32 %v275, %v286
      %v290 = vadd.f32 %v276, %v287
      %v291 = vadd.f32 %v277, %v288
      %s292 = scalar_lea.vmem %s198, 144
      %v293 = vld [vmem:[%s292] sm:$0xff]
      %v294 = vld [vmem:[%s292 + $0x8] sm:$0xff]
      %v295 = vld [vmem:[%s292 + $0x10] sm:$0xff]
      %v296 = vlaneseq
      %v297 = vshrl.u32 %v296, 7
      %v298 = vsub.s32 6, %v297
      %v299 = vrot.slane %v210, %v298
      %v300 = vmul.f32 %v293, %v299
      %v301 = vmul.f32 %v294, %v299
      %v302 = vmul.f32 %v295, %v299
      %v303 = vadd.f32 %v289, %v300
      %v304 = vadd.f32 %v290, %v301
      %v305 = vadd.f32 %v291, %v302
      %s306 = scalar_lea.vmem %s198, 168
      %v307 = vld [vmem:[%s306] sm:$0xff]
      %v308 = vld [vmem:[%s306 + $0x8] sm:$0xff]
      %v309 = vld [vmem:[%s306 + $0x10] sm:$0xff]
      %v310 = vlaneseq
      %v311 = vshrl.u32 %v310, 7
      %v312 = vsub.s32 7, %v311
      %v313 = vrot.slane %v210, %v312
      %v314 = vmul.f32 %v307, %v313
      %v315 = vmul.f32 %v308, %v313
      %v316 = vmul.f32 %v309, %v313
      %v317 = vadd.f32 %v303, %v314
      %v318 = vadd.f32 %v304, %v315
      %v319 = vadd.f32 %v305, %v316
      %s320 = scalar_lea.vmem %s198, 192
      %v321 = vld [vmem:[%s320] sm:$0xff]
      %v322 = vld [vmem:[%s320 + $0x8] sm:$0xff]
      %v323 = vld [vmem:[%s320 + $0x10] sm:$0xff]
      %v324 = vlaneseq
      %v325 = vshrl.u32 %v324, 7
      %v326 = vsub.s32 0, %v325
      %v327 = vrot.slane %v211, %v326
      %v328 = vmul.f32 %v321, %v327
      %v329 = vmul.f32 %v322, %v327
      %v330 = vmul.f32 %v323, %v327
      %v331 = vadd.f32 %v317, %v328
      %v332 = vadd.f32 %v318, %v329
      %v333 = vadd.f32 %v319, %v330
      %v334 = vld [vmem:[%s2] sm:$0x1]
      %v336 = vlaneseq
      %v337 = vshrl.u32 %v336, 7
      %v338 = vsub.s32 0, %v337
      %v339 = vrot.slane %v334, %v338
      %v341 = vadd.f32 %v331, %v339
      %v342 = vadd.f32 %v332, %v339
      %v343 = vadd.f32 %v333, %v339
      %v344 = vmax.f32 %v341, 0.0
      %v345 = vmax.f32 %v342, 0.0
      %v346 = vmax.f32 %v343, 0.0
      %347 = vst [vmem:[%s208] sm:$0xff] %v344
      %348 = vst [vmem:[%s208 + $0x8] sm:$0xff] %v345
      %349 = vst [vmem:[%s208 + $0x10] sm:$0xff] %v346
      %s350 = smul.u32 3, %s19
      %p351 = scmp.lt.s32.totalorder %s18, 1
      %s352 = scalar_select %p351, %s18, 1
      %p353 = scmp.lt.s32.totalorder %s350, 2
      %s354 = scalar_select %p353, %s350, 2
      %s355 = smul.addr %s352, 3
      %s356 = sadd.s32 %s354, %s355
      %s357 = smul.addr %s356, 8
      %s358 = scalar_lea.vmem %s3, %s357
      // Predicated region
      $region33: #{depthwise_conv2d_subsampling.3} parent=31 // pred_check
        %p359 = pneg %p116
      $region34: #{depthwise_conv2d_subsampling.3} parent=31 // pred_check_branch
        %361 = sbr.rel (%p359) target = $region36
      $region35: #{depthwise_conv2d_subsampling.3} parent=31 // pred_region
        %s362 = smul.u32 3, %s19
      $region36: #{depthwise_conv2d_subsampling.3} parent=31 // pred_fallthru
        _
    $region32: #{depthwise_conv2d_subsampling.3} parent=5 // pred_fallthru
      _
    %p363 = scmp.le.s32.totalorder 2, %s9
    // Predicated region
    $region37: #{depthwise_conv2d_subsampling.3} parent=5 // pred_check
      %p364 = pneg %p363
    $region38: #{depthwise_conv2d_subsampling.3} parent=5 // pred_check_branch
      %366 = sbr.rel (%p364) target = $region40
    $region39: #{depthwise_conv2d_subsampling.3} parent=5 // pred_region
      %s367 = ssub.s32 %s9, 2
      // Predicated region
      $region41: #{depthwise_conv2d_subsampling.3} parent=39 // pred_check
        %p368 = pneg %p122
      $region42: #{depthwise_conv2d_subsampling.3} parent=39 // pred_check_branch
        %370 = sbr.rel (%p368) target = $region44
      $region43: #{depthwise_conv2d_subsampling.3} parent=39 // pred_region
        %s371 = smul.u32 3, %s21
        %p372 = scmp.lt.s32.totalorder %s20, 1
        %s373 = scalar_select %p372, %s20, 1
        %p374 = scmp.lt.s32.totalorder %s371, 2
        %s375 = scalar_select %p374, %s371, 2
        %s376 = smul.addr %s373, 3
        %s377 = sadd.s32 %s375, %s376
        %s378 = smul.addr %s377, 8
        %s379 = scalar_lea.vmem %s3, %s378
      $region44: #{depthwise_conv2d_subsampling.3} parent=39 // pred_fallthru
        _
    $region40: #{depthwise_conv2d_subsampling.3} parent=5 // pred_fallthru
      _
  $region6: #{depthwise_conv2d_subsampling.3} parent=0 // loop_footer
    %s13 = sadd.s32 1, %s9
  $region7: #{depthwise_conv2d_subsampling.3} parent=0 // loop_footer_branch
    %8 = sbr.rel target = $region3
  $region8: #{depthwise_conv2d_subsampling.3} parent=0 // loop_exit
    _

</llo_original>
